<compile_context>
chip_gen: v5e
topology: v5e:2x2
jax: 0.10.0
libtpu: 0.0.40
codegen_flags: <defaults>
</compile_context>

<pallas_src>
import jax
import jax.numpy as jnp
from jax.experimental import pallas as pl
from jax.experimental.pallas import tpu as pltpu


def _vmem_capacity_bytes():
    try:
        return int(pltpu.get_tpu_info().vmem_capacity_bytes)
    except Exception:
        return 64 << 20   # conservative (v7x-sized) fallback


def _choose_batch_block(n, per_image_bytes, target_bytes, vmem_ceiling):
    """Largest divisor of n such that double-buffered in+out blocks fit the VMEM
    budget and ~target_bytes, while keeping >= min(n, 4) grid steps."""
    budget = max(vmem_ceiling - (8 << 20), 4 * per_image_bytes)
    cap_by_vmem = max(1, budget // (4 * per_image_bytes))
    cap_by_target = max(1, target_bytes // max(per_image_bytes, 1))
    cap_by_grid = max(1, n // min(n, 4))
    cap = min(n, cap_by_vmem, cap_by_target, cap_by_grid)
    for d in range(int(cap), 0, -1):
        if n % d == 0:
            return d
    return 1


def _make_kernel(inv_hw):
    def kernel(x_ref, mt_ref, c_ref, o_ref):
        x = x_ref[...]                                       # (nb, C, HW), native dtype
        # Global pooling over the lane (spatial) axis: f32-accumulated sum for
        # the mean, native-dtype max (exact) -- no full-block f32 copy.
        s = jnp.sum(x, axis=-1, dtype=jnp.float32)           # (nb, C)
        mx = jnp.max(x, axis=-1).astype(jnp.float32)         # (nb, C)
        pooled = s * inv_hw + mx                             # (nb, C)
        # Folded affine channel MLP, batched over the whole block: one matmul.
        z = jnp.dot(pooled, mt_ref[...], preferred_element_type=jnp.float32)
        gate = jax.nn.sigmoid(z + c_ref[...])                # (nb, C)
        # One whole-block gated store (lane-broadcast of the per-channel gate).
        o_ref[...] = (x * gate[:, :, None].astype(x.dtype)).astype(o_ref.dtype)

    return kernel


def spatial_attention(x_nchw, w1, b1, w2, b2):
    """SpatialAttention forward.

    x_nchw: (N, C, H, W); w1: (hidden, C); b1: (hidden,); w2: (C, hidden); b2: (C,).
    Output dtype matches x_nchw.dtype (pass bf16 to halve HBM traffic).
    """
    N, C, H, W = x_nchw.shape
    HW = H * W
    dtype = x_nchw.dtype

    # Fold the affine channel MLP in the wrapper (tiny, done once):
    #   gate = sigmoid(M @ (avg + mx) + 2c),  M = W2@W1,  c = W2@b1 + b2.
    w1f = jnp.asarray(w1, jnp.float32)
    w2f = jnp.asarray(w2, jnp.float32)
    b1f = jnp.asarray(b1, jnp.float32)
    b2f = jnp.asarray(b2, jnp.float32)
    mt = (w2f @ w1f).T                                   # (C, C); kernel does pooled @ Mt
    c_row = (2.0 * (w2f @ b1f + b2f)).reshape(1, C)      # (1, C)

    x = x_nchw.reshape(N, C, HW)                         # contiguous reshape: no HBM copy

    per_image_bytes = C * HW * jnp.dtype(dtype).itemsize
    vmem_cap = _vmem_capacity_bytes()
    if vmem_cap <= (64 << 20):      # v7x-class chip: 64 MiB VMEM, leave headroom
        target_bytes = 2 << 20
        vmem_ceiling = 48 << 20
    else:                           # v5e / v6e: 128 MiB VMEM
        target_bytes = 8 << 20
        vmem_ceiling = 96 << 20

    nb = _choose_batch_block(N, per_image_bytes, target_bytes, vmem_ceiling)
    grid_n = N // nb
    block_bytes = nb * per_image_bytes

    # TODO(synk): for N == 1 (grid_n == 1) or single images larger than the block
    # target, split the HW axis onto a second ("arbitrary") grid axis with pooled
    # sums/maxes accumulated in scratch (two-pass pool-then-gate); not needed at
    # these sizes and keeps this version single-pass.

    weights_bytes = 2 * (C * C + C) * 4
    vmem_limit = 4 * block_bytes + weights_bytes + (4 << 20)   # dbl-buffered in+out + slack
    vmem_limit = int(min(max(vmem_limit, 32 << 20), vmem_ceiling))

    kernel = _make_kernel(1.0 / float(HW))

    out = pl.pallas_call(
        kernel,
        out_shape=jax.ShapeDtypeStruct((N, C, HW), dtype),
        grid_spec=pltpu.PrefetchScalarGridSpec(
            num_scalar_prefetch=0,
            grid=(grid_n,),
            in_specs=[
                pl.BlockSpec((nb, C, HW), lambda n: (n, 0, 0)),
                pl.BlockSpec((C, C), lambda n: (0, 0)),
                pl.BlockSpec((1, C), lambda n: (0, 0)),
            ],
            out_specs=pl.BlockSpec((nb, C, HW), lambda n: (n, 0, 0)),
        ),
        compiler_params=pltpu.CompilerParams(
            dimension_semantics=("parallel",),
            vmem_limit_bytes=vmem_limit,
        ),
    )(x, mt, c_row)

    return out.reshape(N, C, H, W)


def _reference(x, w1, b1, w2, b2):
    # Pure-JAX reference of the PyTorch forward (unfolded two-conv MLP).
    avg = jnp.mean(x, axis=(2, 3))                            # (N, C)
    mx = jnp.max(x, axis=(2, 3))                              # (N, C)

    def mlp(p):
        h = p @ w1.T + b1
        return h @ w2.T + b2

    gate = jax.nn.sigmoid(mlp(avg) + mlp(mx))                 # (N, C)
    return x * gate[:, :, None, None]


if __name__ == "__main__":
    key = jax.random.PRNGKey(0)
    kx, k1, k2, k3, k4, kx2 = jax.random.split(key, 6)

    # Case 1: aligned shapes, f32 (C multiple of 8, H*W multiple of 128).
    N, C, H, W = 2, 16, 16, 16
    hidden = C // 8
    x = jax.random.normal(kx, (N, C, H, W), dtype=jnp.float32)
    w1 = jax.random.normal(k1, (hidden, C), dtype=jnp.float32) * 0.1
    b1 = jax.random.normal(k2, (hidden,), dtype=jnp.float32) * 0.1
    w2 = jax.random.normal(k3, (C, hidden), dtype=jnp.float32) * 0.1
    b2 = jax.random.normal(k4, (C,), dtype=jnp.float32) * 0.1

    out = jax.block_until_ready(spatial_attention(x, w1, b1, w2, b2))
    ref = _reference(x, w1, b1, w2, b2)
    assert out.shape == x.shape
    assert jnp.allclose(out, ref, atol=1e-4, rtol=1e-4), "f32 aligned mismatch"

    # Case 2: unaligned C / H*W (full-extent blocks, no pad/slice) and nb > 1.
    N2, C2, H2, W2 = 8, 12, 5, 7
    hidden2 = C2 // 4
    x2 = jax.random.normal(kx2, (N2, C2, H2, W2), dtype=jnp.float32)
    w1b = jax.random.normal(k1, (hidden2, C2), dtype=jnp.float32) * 0.1
    b1b = jax.random.normal(k2, (hidden2,), dtype=jnp.float32) * 0.1
    w2b = jax.random.normal(k3, (C2, hidden2), dtype=jnp.float32) * 0.1
    b2b = jax.random.normal(k4, (C2,), dtype=jnp.float32) * 0.1
    out2 = jax.block_until_ready(spatial_attention(x2, w1b, b1b, w2b, b2b))
    ref2 = _reference(x2, w1b, b1b, w2b, b2b)
    assert jnp.allclose(out2, ref2, atol=1e-4, rtol=1e-4), "unaligned-shape mismatch"

    # Case 3: bf16 I/O (HBM-traffic halving); pooling/MLP stay f32 in-kernel.
    xb = x.astype(jnp.bfloat16)
    out3 = jax.block_until_ready(spatial_attention(xb, w1, b1, w2, b2))
    assert out3.dtype == jnp.bfloat16
    ref3 = _reference(xb.astype(jnp.float32), w1, b1, w2, b2)
    assert jnp.allclose(out3.astype(jnp.float32), ref3, atol=2e-2, rtol=2e-2), "bf16 mismatch"

    print("KERNEL_OK")
</pallas_src>

<mosaic_0001>
module attributes {stable_mosaic.version = 11 : i64} {
  func.func @kernel(%arg0: i32, %arg1: memref<1x16x256xf32, #tpu.memory_space<vmem>>, %arg2: memref<16x16xf32, #tpu.memory_space<vmem>>, %arg3: memref<1x16xf32, #tpu.memory_space<vmem>>, %arg4: memref<1x16x256xf32, #tpu.memory_space<vmem>>) attributes {dimension_semantics = [#tpu.dimension_semantics<parallel>], iteration_bounds = array<i64: 2>, scalar_prefetch = 0 : i64, scratch_operands = 0 : i64, tpu.core_type = #tpu.core_type<tc>, window_params = [{transform_indices = @transform_0, window_bounds = array<i64: 1, 16, 256>}, {pipeline_mode = #tpu.pipeline_mode<synchronous>, transform_indices = @transform_1, window_bounds = array<i64: 16, 16>}, {pipeline_mode = #tpu.pipeline_mode<synchronous>, transform_indices = @transform_2, window_bounds = array<i64: 1, 16>}, {transform_indices = @transform_3, window_bounds = array<i64: 1, 16, 256>}]} {
    %c0 = arith.constant 0 : index
    %c0_0 = arith.constant 0 : index
    %c0_1 = arith.constant 0 : index
    %0 = vector.load %arg1[%c0, %c0_0, %c0_1] : memref<1x16x256xf32, #tpu.memory_space<vmem>>, vector<1x16x256xf32>
    %cst = arith.constant dense<0.000000e+00> : vector<1x16xf32>
    %1 = vector.multi_reduction <add>, %0, %cst [2] : vector<1x16x256xf32> to vector<1x16xf32>
    %cst_2 = arith.constant dense<0xFF800000> : vector<1x16xf32>
    %2 = vector.multi_reduction <maximumf>, %0, %cst_2 [2] : vector<1x16x256xf32> to vector<1x16xf32>
    %cst_3 = arith.constant 3.906250e-03 : f32
    %3 = vector.broadcast %cst_3 : f32 to vector<1x16xf32>
    %4 = arith.mulf %1, %3 : vector<1x16xf32>
    %5 = arith.addf %4, %2 : vector<1x16xf32>
    %c0_4 = arith.constant 0 : index
    %c0_5 = arith.constant 0 : index
    %6 = vector.load %arg2[%c0_4, %c0_5] : memref<16x16xf32, #tpu.memory_space<vmem>>, vector<16x16xf32>
    %cst_6 = arith.constant dense<0.000000e+00> : vector<1x16xf32>
    %7 = tpu.matmul %5, %6, %cst_6 {dimension_numbers = #tpu.dot_dimension_numbers<[1], [0], [0], [1], [0, 0, 1, 1], [], []>} : vector<1x16xf32>, vector<16x16xf32>, vector<1x16xf32> -> vector<1x16xf32>
    %c0_7 = arith.constant 0 : index
    %c0_8 = arith.constant 0 : index
    %8 = vector.load %arg3[%c0_7, %c0_8] : memref<1x16xf32, #tpu.memory_space<vmem>>, vector<1x16xf32>
    %9 = arith.addf %7, %8 : vector<1x16xf32>
    %10 = arith.negf %9 : vector<1x16xf32>
    %11 = math.exp %10 : vector<1x16xf32>
    %cst_9 = arith.constant 1.000000e+00 : f32
    %12 = vector.broadcast %cst_9 : f32 to vector<1x16xf32>
    %13 = arith.addf %12, %11 : vector<1x16xf32>
    %14 = arith.divf %12, %13 : vector<1x16xf32>
    %15 = vector.shape_cast %14 : vector<1x16xf32> to vector<1x16x1xf32>
    %16 = vector.broadcast %15 : vector<1x16x1xf32> to vector<1x16x256xf32>
    %17 = arith.mulf %0, %16 : vector<1x16x256xf32>
    %c0_10 = arith.constant 0 : index
    %c0_11 = arith.constant 0 : index
    %c0_12 = arith.constant 0 : index
    %18 = vector.load %arg4[%c0_10, %c0_11, %c0_12] : memref<1x16x256xf32, #tpu.memory_space<vmem>>, vector<1x16x256xf32>
    tpu.vector_store %arg4[%c0_10, %c0_11, %c0_12], %17 {strides = array<i32>} : memref<1x16x256xf32, #tpu.memory_space<vmem>>, vector<1x16x256xf32>,
    return
  }
  func.func @transform_0(%arg0: i32) -> (i32, i32, i32) {
    %c0_i32 = arith.constant 0 : i32
    %c0_i32_0 = arith.constant 0 : i32
    %c0_i32_1 = arith.constant 0 : i32
    return %arg0, %c0_i32, %c0_i32_0 : i32, i32, i32
  }
  func.func @transform_1(%arg0: i32) -> (i32, i32) {
    %c0_i32 = arith.constant 0 : i32
    %c0_i32_0 = arith.constant 0 : i32
    %c0_i32_1 = arith.constant 0 : i32
    return %c0_i32, %c0_i32_0 : i32, i32
  }
  func.func @transform_2(%arg0: i32) -> (i32, i32) {
    %c0_i32 = arith.constant 0 : i32
    %c0_i32_0 = arith.constant 0 : i32
    %c0_i32_1 = arith.constant 0 : i32
    return %c0_i32, %c0_i32_0 : i32, i32
  }
  func.func @transform_3(%arg0: i32) -> (i32, i32, i32) {
    %c0_i32 = arith.constant 0 : i32
    %c0_i32_0 = arith.constant 0 : i32
    %c0_i32_1 = arith.constant 0 : i32
    return %arg0, %c0_i32, %c0_i32_0 : i32, i32, i32
  }
}

</mosaic_0001>

<llo_original>
// kernel: tpu_custom_call.1
$region0: #{tpu_custom_call.1}
  #allocation0 [shape = 'u32[]', space=smem, size = 0x4, offset = 0x4, fixed_abs, tag = 'smem constant byte address 0x4 - core index']
  #allocation1 [shape = 'u32[72,128]{1,0:T(1,128)}', space=vmem, size = 0x9000, scoped, tag = 'internal scratch']
  %s0 = inlined_call_operand.hbm [shape: f32[2,16,256], index: 0, kind: input, shape index: {}]
  %s1 = inlined_call_operand.hbm [shape: f32[16,16], index: 1, kind: input, shape index: {}]
  %s2 = inlined_call_operand.vmem [shape: f32[1,16], index: 2, kind: input, shape index: {}]
  %s3 = inlined_call_operand.hbm [shape: f32[2,16,256], index: 3, kind: output, shape index: {}]
  %s4 = sld [smem:[#allocation0]]
  $region53: #{tpu_custom_call.1} parent=0
    _
  %s6 = ssub.s32 1, %s4
  %s7 = scalar_select 0, %s6, %s4
  $region1: #{tpu_custom_call.1} parent=0
    #allocation2 [shape = 'u8[32768]{0}', space=vmem, size = 0x8000, scoped, tag = 'input window, operand 0']
    #allocation3 [shape = 's32[2]{0}', space=sflag, size = 0x8, scoped, tag = 'scoped memory for tpu_custom_call.1']
    #allocation4 [shape = 's32[2]{0}', space=sflag, size = 0x8, scoped, tag = 'scoped memory for tpu_custom_call.1']
    #allocation5 [shape = 'u8[8192]{0}', space=vmem, size = 0x2000, scoped, tag = 'input window, operand 1, single buffered']
    #allocation6 [shape = 's32[1]{0}', space=sflag, size = 0x4, scoped, tag = 'scoped memory for tpu_custom_call.1']
    #allocation7 [shape = 'u8[32768]{0}', space=vmem, size = 0x8000, scoped, tag = 'output window, operand 0']
    %8 = vsyncpa [#allocation3], 0
    %s9 = scalar_lea.sflag [#allocation3], 1
    %10 = vsyncpa %s9, 0
    %11 = vsyncpa [#allocation6], 0
    %12 = vsyncpa [#allocation4], 0
    %s13 = scalar_lea.sflag [#allocation4], 1
    %14 = vsyncpa %s13, 0
    loop: start=0, step=1, limit=4
    $region2: #{tpu_custom_call.1} parent=1 // loop_pre_header
      _
    $region3: #{tpu_custom_call.1} parent=1 // loop_header
      %s16 = sphi 0, %s20
      %p17 = scmp.ge.s32.totalorder %s16, 4
      %s26 = sphi 0, %s28
      %s29 = sphi 0, %s26
      %s30 = sphi 0, %s29
      %s46 = sphi 0, %s30
      %s50 = sphi 0, %s50
      %s52 = sphi 0, %s50
      %s53 = sphi 0, %s52
      %s67 = sphi 0, %s53
      %s71 = sphi 0, %s71
      %s73 = sphi 0, %s71
      %s74 = sphi 0, %s73
      %s88 = sphi 0, %s74
      %s94 = sphi 0, %s96
      %s97 = sphi 0, %s94
      %s98 = sphi 0, %s97
      %s114 = sphi 0, %s98
    $region4: #{tpu_custom_call.1} parent=1 // loop_header_branch
      %19 = sbr.rel (%p17) target = $region8
    $region5: #{tpu_custom_call.1} parent=1 // loop_body
      %s21 = ssub.s32 %s16, 1
      %s22 = ssub.s32 %s16, 2
      %s23 = sadd.s32 %s16, 1
      %s24 = ssub.s32 %s16, %s23
      %p25 = scmp.eq.s32.totalorder %s24, 0
      %s27 = sadd.s32 %s26, 1
      %s28 = scalar_select %p25, %s26, %s27
      %p31 = pneg %p25
      %p32 = scmp.eq.s32.totalorder %s16, 1
      %p33 = por %p31, %p32
      %p34 = scmp.ne.s32.totalorder %s26, %s29
      %p35 = scmp.eq.s32.totalorder %s16, 0
      %p36 = por %p34, %p35
      %p37 = scmp.ne.s32.totalorder %s26, %s29
      %p38 = scmp.eq.s32.totalorder %s21, 1
      %p39 = por %p37, %p38
      %p40 = scmp.ne.s32.totalorder %s29, %s30
      %p41 = scmp.eq.s32.totalorder %s21, 0
      %p42 = por %p40, %p41
      %p43 = scmp.ne.s32.totalorder %s29, %s30
      %p44 = scmp.eq.s32.totalorder %s22, 1
      %p45 = por %p43, %p44
      %p47 = scmp.ne.s32.totalorder %s30, %s46
      %p48 = scmp.eq.s32.totalorder %s22, 0
      %p49 = por %p47, %p48
      %s51 = sadd.s32 %s50, 1
      %p54 = scmp.eq.s32.totalorder %s16, 1
      %p55 = scmp.ne.s32.totalorder %s50, %s52
      %p56 = scmp.eq.s32.totalorder %s16, 0
      %p57 = por %p55, %p56
      %p58 = scmp.ne.s32.totalorder %s50, %s52
      %p59 = scmp.eq.s32.totalorder %s21, 1
      %p60 = por %p58, %p59
      %p61 = scmp.ne.s32.totalorder %s52, %s53
      %p62 = scmp.eq.s32.totalorder %s21, 0
      %p63 = por %p61, %p62
      %p64 = scmp.ne.s32.totalorder %s52, %s53
      %p65 = scmp.eq.s32.totalorder %s22, 1
      %p66 = por %p64, %p65
      %p68 = scmp.ne.s32.totalorder %s53, %s67
      %p69 = scmp.eq.s32.totalorder %s22, 0
      %p70 = por %p68, %p69
      %s72 = sadd.s32 %s71, 1
      %p75 = scmp.eq.s32.totalorder %s16, 1
      %p76 = scmp.ne.s32.totalorder %s71, %s73
      %p77 = scmp.eq.s32.totalorder %s16, 0
      %p78 = por %p76, %p77
      %p79 = scmp.ne.s32.totalorder %s71, %s73
      %p80 = scmp.eq.s32.totalorder %s21, 1
      %p81 = por %p79, %p80
      %p82 = scmp.ne.s32.totalorder %s73, %s74
      %p83 = scmp.eq.s32.totalorder %s21, 0
      %p84 = por %p82, %p83
      %p85 = scmp.ne.s32.totalorder %s73, %s74
      %p86 = scmp.eq.s32.totalorder %s22, 1
      %p87 = por %p85, %p86
      %p89 = scmp.ne.s32.totalorder %s74, %s88
      %p90 = scmp.eq.s32.totalorder %s22, 0
      %p91 = por %p89, %p90
      %s92 = ssub.s32 %s16, %s23
      %p93 = scmp.eq.s32.totalorder %s92, 0
      %s95 = sadd.s32 %s94, 1
      %s96 = scalar_select %p93, %s94, %s95
      %p99 = pneg %p93
      %p100 = scmp.eq.s32.totalorder %s16, 1
      %p101 = por %p99, %p100
      %p102 = scmp.ne.s32.totalorder %s94, %s97
      %p103 = scmp.eq.s32.totalorder %s16, 0
      %p104 = por %p102, %p103
      %p105 = scmp.ne.s32.totalorder %s94, %s97
      %p106 = scmp.eq.s32.totalorder %s21, 1
      %p107 = por %p105, %p106
      %p108 = scmp.ne.s32.totalorder %s97, %s98
      %p109 = scmp.eq.s32.totalorder %s21, 0
      %p110 = por %p108, %p109
      %p111 = scmp.ne.s32.totalorder %s97, %s98
      %p112 = scmp.eq.s32.totalorder %s22, 1
      %p113 = por %p111, %p112
      %p115 = scmp.ne.s32.totalorder %s98, %s114
      %p116 = scmp.eq.s32.totalorder %s22, 0
      %p117 = por %p115, %p116
      %p118 = scmp.le.s32.totalorder 1, %s16
      %p119 = scmp.lt.s32.totalorder %s16, 3
      %p120 = pnand %p118, %p119
      %p121 = pneg %p120
      // Predicated region
      $region9: #{tpu_custom_call.1} parent=5 // pred_check
        _
      $region10: #{tpu_custom_call.1} parent=5 // pred_check_branch
        %123 = sbr.rel (%p120) target = $region12
      $region11: #{tpu_custom_call.1} parent=5 // pred_region
        %s124 = ssub.s32 %s16, 1
        // Predicated region
        $region13: #{tpu_custom_call.1} parent=11 // pred_check
          %p125 = pneg %p63
        $region14: #{tpu_custom_call.1} parent=11 // pred_check_branch
          %127 = sbr.rel (%p125) target = $region16
        $region15: #{tpu_custom_call.1} parent=11 // pred_region
          %129 = vsyncadd [#allocation6], 0
          %s130 = sshll.u32 %s1, 4
          %s131 = int_to_ptr.hbm [resolvable:$true] %s130
          %s132 = sshll.u32 [#allocation5], 4
          %s133 = int_to_ptr.vmem [resolvable:$true] %s132
          %138 = dma.hbm_to_vmem [thread:$0]  %s131, 256, %s133, [#allocation6], 128, 128, 8
        $region16: #{tpu_custom_call.1} parent=11 // pred_fallthru
          _
        // Predicated region
        $region17: #{tpu_custom_call.1} parent=11 // pred_check
          %p139 = pneg %p84
        $region18: #{tpu_custom_call.1} parent=11 // pred_check_branch
          %141 = sbr.rel (%p139) target = $region20
        $region19: #{tpu_custom_call.1} parent=11 // pred_region
          _
        $region20: #{tpu_custom_call.1} parent=11 // pred_fallthru
          _
      $region12: #{tpu_custom_call.1} parent=5 // pred_fallthru
        _
      %p142 = scmp.lt.s32.totalorder %s16, 2
      // Predicated region
      $region21: #{tpu_custom_call.1} parent=5 // pred_check
        %p143 = pneg %p142
      $region22: #{tpu_custom_call.1} parent=5 // pred_check_branch
        %145 = sbr.rel (%p143) target = $region24
      $region23: #{tpu_custom_call.1} parent=5 // pred_region
        // Predicated region
        $region25: #{tpu_custom_call.1} parent=23 // pred_check
          %p146 = pneg %p36
        $region26: #{tpu_custom_call.1} parent=23 // pred_check_branch
          %148 = sbr.rel (%p146) target = $region28
        $region27: #{tpu_custom_call.1} parent=23 // pred_region
          %s149 = sand.u32 %s26, 1
          %s150 = scalar_lea.sflag [#allocation3], %s149
          %s151 = sand.u32 %s26, 1
          %s152 = smul.addr %s151, 32
          %s153 = scalar_lea.vmem [#allocation2], %s152
          %155 = vsyncadd %s150, 0
          %s156 = smul.addr %s16, 4
          %s157 = smul.addr %s156, 8
          %s158 = scalar_lea.hbm %s0, %s157
          %s159 = sshll.u32 %s158, 4
          %s160 = int_to_ptr.hbm [resolvable:$true] %s159
          %s161 = sshll.u32 %s153, 4
          %s162 = int_to_ptr.vmem [resolvable:$true] %s161
          %167 = dma.hbm_to_vmem [thread:$0]  %s160, 512, %s162, %s150, 256, 256, 16
        $region28: #{tpu_custom_call.1} parent=23 // pred_fallthru
          _
      $region24: #{tpu_custom_call.1} parent=5 // pred_fallthru
        _
      %p168 = scmp.le.s32.totalorder 1, %s16
      %p169 = scmp.lt.s32.totalorder %s16, 3
      %p170 = pnand %p168, %p169
      %p171 = pneg %p170
      // Predicated region
      $region29: #{tpu_custom_call.1} parent=5 // pred_check
        _
      $region30: #{tpu_custom_call.1} parent=5 // pred_check_branch
        %173 = sbr.rel (%p170) target = $region32
      $region31: #{tpu_custom_call.1} parent=5 // pred_region
        %s174 = ssub.s32 %s16, 1
        %s175 = sand.u32 %s29, 1
        %s176 = scalar_lea.sflag [#allocation3], %s175
        %s177 = sand.u32 %s29, 1
        %s178 = smul.addr %s177, 32
        %s179 = scalar_lea.vmem [#allocation2], %s178
        // Predicated region
        $region33: #{tpu_custom_call.1} parent=31 // pred_check
          %p180 = pneg %p42
        $region34: #{tpu_custom_call.1} parent=31 // pred_check_branch
          %182 = sbr.rel (%p180) target = $region36
        $region35: #{tpu_custom_call.1} parent=31 // pred_region
          %184 = dma.done %s176, 512
        $region36: #{tpu_custom_call.1} parent=31 // pred_fallthru
          _
        // Predicated region
        $region37: #{tpu_custom_call.1} parent=31 // pred_check
          %p185 = pneg %p63
        $region38: #{tpu_custom_call.1} parent=31 // pred_check_branch
          %187 = sbr.rel (%p185) target = $region40
        $region39: #{tpu_custom_call.1} parent=31 // pred_region
          %189 = dma.done [#allocation6], 256
        $region40: #{tpu_custom_call.1} parent=31 // pred_fallthru
          _
        %s190 = sand.u32 %s29, 1
        %s191 = scalar_lea.sflag [#allocation3], %s190
        %s192 = sand.u32 %s29, 1
        %s193 = smul.addr %s192, 32
        %s194 = scalar_lea.vmem [#allocation2], %s193
        %p195 = pneg %p42
        %p196 = pneg %p39
        %p197 = pneg %p63
        %p198 = pneg %p60
        %p199 = pneg %p84
        %p200 = pneg %p81
        %p201 = pneg %p110
        %p202 = pneg %p107
        %s203 = sand.u32 %s97, 1
        %s204 = scalar_lea.sflag [#allocation4], %s203
        %s205 = sand.u32 %s97, 1
        %s206 = smul.addr %s205, 32
        %s207 = scalar_lea.vmem [#allocation7], %s206
        %v208 = vld [vmem:[%s179] sm:$0xff]
        %v209 = vld [vmem:[%s179 + $0x8] sm:$0xff]
        %v210 = vld [vmem:[%s179 + $0x10] sm:$0xff]
        %v211 = vld [vmem:[%s179 + $0x18] sm:$0xff]
        %v212 = vadd.f32 %v208, %v209
        %213 = vadd.xlane.f32.xlu0 %v212
        %v214 = vpop.xlane.xlu0 %213
        %v215 = vadd.f32 %v210, %v211
        %216 = vadd.xlane.f32.xlu0 %v215
        %v217 = vpop.xlane.xlu0 %216
        %v218 = vmax.f32 %v208, %v209
        %219 = vmax.xlane.f32.xlu0 %v218
        %v220 = vpop.xlane.xlu0 %219
        %v221 = vmax.f32 %v210, %v211
        %222 = vmax.xlane.f32.xlu0 %v221
        %v223 = vpop.xlane.xlu0 %222
        %v224 = vmul.f32 %v214, 0.00390625
        %v225 = vmul.f32 %v217, 0.00390625
        %v226 = vadd.f32 %v224, %v220
        %v227 = vadd.f32 %v225, %v223
        %v228 = vld [vmem:[#allocation5] sm:$0xff]
        %v229 = vld [vmem:[#allocation5 + $0x8] sm:$0xff]
        %v230 = vld [vmem:[%s2] sm:$0x1]
        %v233 = vlaneseq
        %v234 = vand.u32 %v233, 127
        %v235 = vperm.slane %v226, %v234
        %v236 = vadd.s32 %v234, 4294967288
        %v237 = vperm.slane %v227, %v236
        %vm238 = vcmask 130112
        %v239 = vsel %vm238, %v237, %v235
        %vm240 = vcmask 130048
        %v241 = vsel %vm240, %v239, 0
        %243 = vmatpush.msra.mxu0 0.0
        %244 = vmatpush.msra.mxu0 0.0
        %245 = vmatpush.msra.mxu0 0.0
        %246 = vmatpush.msra.mxu0 0.0
        %247 = vmatpush.msra.mxu0 0.0
        %248 = vmatpush.msra.mxu0 0.0
        %249 = vmatpush.msra.mxu0 0.0
        %250 = vmatpush.msra.mxu0 0.0
        %251 = vmatpush.msra.mxu0 0.0
        %252 = vmatpush.msra.mxu0 0.0
        %253 = vmatpush.msra.mxu0 0.0
        %254 = vmatpush.msra.mxu0 0.0
        %255 = vmatpush.msra.mxu0 0.0
        %256 = vmatpush.msra.mxu0 0.0
        %257 = vmatpush.msra.mxu0 %v229
        %258 = vmatpush.msra.mxu0 %v228
        %259 = vmatmul.f32.gmra.mxu0 %v241
        %v260 = vpop.f32.mrf.mxu0
        %v261 = vadd.f32 %v230, %v260
        %262 = vdwg.mxu0
        %v263 = vxor.u32 %v261, 2147483648
        %v264 = vmul.f32 %v263, 1.442695
        %v265 = vpow.pop %v264
        %v266 = vadd.f32 %v265, 1.0
        %v267 = vrcp.pop %v266
        %v268 = vmul.f32 %v266, %v267
        %v269 = vsub.f32 1.0, %v268
        %v270 = vmul.f32 %v267, %v269
        %v271 = vadd.f32 %v267, %v270
        %vm272 = vweird.f32 %v266
        %vm273 = vweird.f32 %v267
        %vm274 = vmor %vm272, %vm273
        %v275 = vsel %vm274, %v267, %v271
        %v276 = vand.u32 2147483647, %v266
        %vm277 = vcmp.eq.f32.partialorder %v276, 8.507059e+37
        %v278 = vand.u32 %v266, 2147483648
        %v279 = vor.u32 1.1754944e-38, %v278
        %v280 = vsel %vm277, %v279, %v275
        %v281 = vmul.f32 1.0, %v280
        %v282 = vperm.slane %v281, 0
        %v283 = vlaneseq
        %v284 = vshrl.u32 %v283, 7
        %286 = vset.pattern.permute.xlu0 %v284
        %287 = vperm.xlu0 %286, %v282
        %v288 = vpop.permute.xlu0 %287
        %v289 = vlaneseq
        %v290 = vshrl.u32 %v289, 7
        %v291 = vadd.s32 %v290, 8
        %292 = vset.pattern.permute.xlu0 %v291
        %293 = vperm.xlu0 %292, %v282
        %v294 = vpop.permute.xlu0 %293
        %v295 = vmul.f32 %v208, %v288
        %v296 = vmul.f32 %v209, %v288
        %v297 = vmul.f32 %v210, %v294
        %v298 = vmul.f32 %v211, %v294
        %299 = vst [vmem:[%s207] sm:$0xff] %v295
        %300 = vst [vmem:[%s207 + $0x8] sm:$0xff] %v296
        %301 = vst [vmem:[%s207 + $0x10] sm:$0xff] %v297
        %302 = vst [vmem:[%s207 + $0x18] sm:$0xff] %v298
        %s303 = sand.u32 %s97, 1
        %s304 = scalar_lea.sflag [#allocation4], %s303
        %s305 = sand.u32 %s97, 1
        %s306 = smul.addr %s305, 32
        %s307 = scalar_lea.vmem [#allocation7], %s306
        // Predicated region
        $region41: #{tpu_custom_call.1} parent=31 // pred_check
          %p308 = pneg %p107
        $region42: #{tpu_custom_call.1} parent=31 // pred_check_branch
          %310 = sbr.rel (%p308) target = $region44
        $region43: #{tpu_custom_call.1} parent=31 // pred_region
          %312 = vsyncadd %s304, 0
          %s313 = smul.addr %s21, 4
          %s314 = smul.addr %s313, 8
          %s315 = scalar_lea.hbm %s3, %s314
          %s316 = sshll.u32 %s307, 4
          %s317 = int_to_ptr.vmem [resolvable:$true] %s316
          %s318 = sshll.u32 %s315, 4
          %s319 = int_to_ptr.hbm [resolvable:$true] %s318
          %324 = dma.vmem_to_hbm [thread:$0]  %s317, 512, %s319, %s304, 256, 256, 16
        $region44: #{tpu_custom_call.1} parent=31 // pred_fallthru
          _
      $region32: #{tpu_custom_call.1} parent=5 // pred_fallthru
        _
      %p325 = scmp.le.s32.totalorder 2, %s16
      // Predicated region
      $region45: #{tpu_custom_call.1} parent=5 // pred_check
        %p326 = pneg %p325
      $region46: #{tpu_custom_call.1} parent=5 // pred_check_branch
        %328 = sbr.rel (%p326) target = $region48
      $region47: #{tpu_custom_call.1} parent=5 // pred_region
        %s329 = ssub.s32 %s16, 2
        // Predicated region
        $region49: #{tpu_custom_call.1} parent=47 // pred_check
          %p330 = pneg %p113
        $region50: #{tpu_custom_call.1} parent=47 // pred_check_branch
          %332 = sbr.rel (%p330) target = $region52
        $region51: #{tpu_custom_call.1} parent=47 // pred_region
          %s333 = sand.u32 %s98, 1
          %s334 = scalar_lea.sflag [#allocation4], %s333
          %s335 = sand.u32 %s98, 1
          %s336 = smul.addr %s335, 32
          %s337 = scalar_lea.vmem [#allocation7], %s336
          %339 = dma.done %s334, 512
        $region52: #{tpu_custom_call.1} parent=47 // pred_fallthru
          _
      $region48: #{tpu_custom_call.1} parent=5 // pred_fallthru
        _
    $region6: #{tpu_custom_call.1} parent=1 // loop_footer
      %s20 = sadd.s32 1, %s16
    $region7: #{tpu_custom_call.1} parent=1 // loop_footer_branch
      %15 = sbr.rel target = $region3
    $region8: #{tpu_custom_call.1} parent=1 // loop_exit
      _
    %340 = vsyncpa [#allocation3], 1
    %s341 = scalar_lea.sflag [#allocation3], 1
    %342 = vsyncpa %s341, 1
    %343 = vsyncpa [#allocation6], 1
    %344 = vsyncpa [#allocation4], 1
    %s345 = scalar_lea.sflag [#allocation4], 1
    %346 = vsyncpa %s345, 1

</llo_original>
